<compile_context>
chip_gen: v7x
topology: tpu7x:2x2x1
jax: 0.10.0
libtpu: 0.0.40
codegen_flags: <defaults>
</compile_context>

<pallas_src>
import math
import functools

import jax
import jax.numpy as jnp
from jax.experimental import pallas as pl
from jax.experimental.pallas import tpu as pltpu

LN_EPS = 1e-5  # nn.LayerNorm default


def _act(x, *, off_act, approx_gelu):
    """F.gelu (exact erf by default) or identity when off_act=True."""
    if off_act:
        return x
    if approx_gelu:
        # tanh-approx GELU: routes the transcendental to the otherwise-idle EUP
        # slot (useful when the VALU slot is binding with bf16 MXU feeds).
        # Slightly different numerics from PyTorch's default F.gelu -> opt-in.
        c = math.sqrt(2.0 / math.pi)
        return 0.5 * x * (1.0 + jnp.tanh(c * (x + 0.044715 * (x * x * x))))
    return 0.5 * x * (1.0 + jax.lax.erf(x * (1.0 / math.sqrt(2.0))))


# --------------------------------------------------------------------------
# Fast path: full (P, H) tile per batch row, LayerNorm moments in-kernel.
# --------------------------------------------------------------------------
def mlp1_fused_kernel(x_ref, g_ref, beta_ref, w1_ref, b1_ref, w2_ref, b2_ref,
                      o_ref, *, off_act, approx_gelu):
    """One grid step: TB batch rows, each a full (P, H) slab (H unpadded, so the
    in-kernel LN moments are exact)."""
    gamma = g_ref[...]                     # (1, H)
    beta = beta_ref[...]                   # (1, H)
    w1 = w1_ref[...]                       # (S, P)   f32 or bf16 MXU feed
    b1 = b1_ref[...]                       # (S, 1)
    w2 = w2_ref[...]                       # (P, S)
    b2 = b2_ref[...]                       # (P, 1)
    mm_dtype = w1.dtype

    for b in range(x_ref.shape[0]):        # static unroll over the batch sub-block
        x = x_ref[b].astype(jnp.float32)   # (P, H)

        # LayerNorm over hidden_size (full, unpadded -> exact moments).
        mean = jnp.mean(x, axis=-1, keepdims=True)
        var = jnp.mean(jnp.square(x - mean), axis=-1, keepdims=True)
        rstd = jax.lax.rsqrt(var + LN_EPS)
        y = (x - mean) * rstd * gamma + beta

        # fc1 (Conv1d P->S, k=1): contraction over patches only.
        h = jnp.dot(w1, y.astype(mm_dtype),
                    preferred_element_type=jnp.float32) + b1      # (S, H) f32 acc
        a = _act(h, off_act=off_act, approx_gelu=approx_gelu)     # dropout = id (eval)

        # fc2 (Conv1d S->P, k=1).
        out = jnp.dot(w2, a.astype(mm_dtype),
                      preferred_element_type=jnp.float32) + b2    # (P, H) f32 acc

        o_ref[b] = (out + x).astype(o_ref.dtype)                  # residual


# --------------------------------------------------------------------------
# Tiled fallback: grid (B, H tiles); LN moments precomputed in the wrapper and
# folded into per-patch scale/shift (scale = rstd, shift = -mean * rstd).
# --------------------------------------------------------------------------
def mlp1_tiled_kernel(x_ref, ss_ref, g_ref, beta_ref, w1_ref, b1_ref, w2_ref,
                      b2_ref, o_ref, *, off_act, approx_gelu):
    x = x_ref[...].astype(jnp.float32)       # (P, TH)
    scale = ss_ref[:, 0:1]                   # (P, 1)
    shift = ss_ref[:, 1:2]                   # (P, 1)
    y = (x * scale + shift) * g_ref[...] + beta_ref[...]

    w1 = w1_ref[...]
    mm_dtype = w1.dtype
    h = jnp.dot(w1, y.astype(mm_dtype),
                preferred_element_type=jnp.float32) + b1_ref[...]   # (S, TH)
    a = _act(h, off_act=off_act, approx_gelu=approx_gelu)
    out = jnp.dot(w2_ref[...], a.astype(mm_dtype),
                  preferred_element_type=jnp.float32) + b2_ref[...]  # (P, TH)
    o_ref[...] = (out + x).astype(o_ref.dtype)


def _round_up(n, m):
    return ((n + m - 1) // m) * m


def _pick_h_tile(h_pad, max_tile):
    for cand in (2048, 1024, 512, 384, 256, 128):
        if cand <= max(max_tile, 128) and h_pad % cand == 0:
            return cand
    return 128


@functools.partial(jax.jit, static_argnames=(
    "use_bf16_matmul", "off_act", "approx_gelu", "force_tiled", "max_h_tile"))
def mlp1_forward(x, w1, b1, w2, b2, gamma, beta, *,
                 use_bf16_matmul=True, off_act=False, approx_gelu=False,
                 force_tiled=False, max_h_tile=1024):
    B, P, H = x.shape
    S = w1.shape[0]

    w_dtype = jnp.bfloat16 if use_bf16_matmul else jnp.float32
    # VMEM-overrun guard (v7x has only 64 MiB VMEM): very large f32 weight pairs
    # are fed to the MXU as bf16 instead (accumulation stays f32).
    if not use_bf16_matmul and 2 * S * P * 4 > 16 * 1024 * 1024:
        w_dtype = jnp.bfloat16

    w1c = w1.astype(w_dtype)
    w2c = w2.astype(w_dtype)
    b1c = b1.astype(jnp.float32).reshape(S, 1)
    b2c = b2.astype(jnp.float32).reshape(P, 1)
    gammac = gamma.astype(jnp.float32).reshape(1, H)
    betac = beta.astype(jnp.float32).reshape(1, H)

    x_bytes = x.dtype.itemsize
    w_bytes = jnp.dtype(w_dtype).itemsize
    kernel_flags = dict(off_act=off_act, approx_gelu=approx_gelu)
    const = dict(pipeline_mode=pl.Buffered(buffer_count=1))  # never re-fetched

    def fast_vmem_bytes(tb):
        io = 2 * 2 * tb * P * H * x_bytes                # x/out blocks, double-buffered
        wts = 2 * S * P * w_bytes + (S + P + 4 * H) * 4  # weights/biases/gamma/beta
        tmp = (3 * P * H + 2 * S * H) * 4                # in-kernel f32 temporaries
        return io + wts + tmp

    vmem_budget = 40 * 1024 * 1024                       # headroom on v7x (64 MiB)
    use_fast = (not force_tiled) and fast_vmem_bytes(1) <= vmem_budget

    if use_fast:
        # Batch sub-block: enough per-step work to amortize the ~0.35 us pipeline
        # overhead, while keeping >= 2 "parallel" grid steps so both v7x
        # TensorCores get work (when B == 1 there is nothing to split).
        tb = 1
        for cand in (8, 4, 2):
            if B % cand == 0 and B // cand >= 2 and fast_vmem_bytes(cand) <= vmem_budget:
                tb = cand
                break
        vmem_limit = int(min(max(2 * fast_vmem_bytes(tb), 16 << 20), 56 << 20))

        grid_spec = pltpu.PrefetchScalarGridSpec(
            num_scalar_prefetch=0,
            grid=(B // tb,),
            in_specs=[
                pl.BlockSpec((tb, P, H), lambda i: (i, 0, 0)),      # x (unpadded)
                pl.BlockSpec((1, H), lambda i: (0, 0), **const),    # gamma
                pl.BlockSpec((1, H), lambda i: (0, 0), **const),    # beta
                pl.BlockSpec((S, P), lambda i: (0, 0), **const),    # W1
                pl.BlockSpec((S, 1), lambda i: (0, 0), **const),    # b1
                pl.BlockSpec((P, S), lambda i: (0, 0), **const),    # W2
                pl.BlockSpec((P, 1), lambda i: (0, 0), **const),    # b2
            ],
            out_specs=pl.BlockSpec((tb, P, H), lambda i: (i, 0, 0)),
        )
        # Output emitted directly in x.dtype at the unpadded shape: no extra
        # slice / convert HBM pass after the kernel.
        return pl.pallas_call(
            functools.partial(mlp1_fused_kernel, **kernel_flags),
            out_shape=jax.ShapeDtypeStruct((B, P, H), x.dtype),
            grid_spec=grid_spec,
            compiler_params=pltpu.CompilerParams(
                dimension_semantics=("parallel",),
                vmem_limit_bytes=vmem_limit,
            ),
        )(x, gammac, betac, w1c, b1c, w2c, b2c)

    # --- Tiled fallback (very large hidden_size): grid over (batch, H tiles). ---
    # The LayerNorm moments span every hidden tile, so they are computed once as
    # a small fused XLA reduction and folded into per-patch scale/shift.
    xf = x.astype(jnp.float32)
    mean = jnp.mean(xf, axis=-1, keepdims=True)
    var = jnp.mean(jnp.square(xf - mean), axis=-1, keepdims=True)
    rstd = jax.lax.rsqrt(var + LN_EPS)
    ss = jnp.concatenate([rstd, -mean * rstd], axis=-1)   # (B, P, 2)

    H_pad = _round_up(H, 128)
    TH = _pick_h_tile(H_pad, max_h_tile)
    n_h = H_pad // TH

    xp = x if H_pad == H else jnp.pad(x, ((0, 0), (0, 0), (0, H_pad - H)))
    gammap = jnp.pad(gammac, ((0, 0), (0, H_pad - H)))
    betap = jnp.pad(betac, ((0, 0), (0, H_pad - H)))

    tile_vmem = (2 * 2 * P * TH * x_bytes + 2 * P * 2 * 4 + 4 * TH * 4
                 + 2 * S * P * w_bytes + (S + P) * 4
                 + (3 * P * TH + 2 * S * TH) * 4)
    vmem_limit = int(min(max(2 * tile_vmem, 16 << 20), 56 << 20))

    grid_spec = pltpu.PrefetchScalarGridSpec(
        num_scalar_prefetch=0,
        grid=(B, n_h),
        in_specs=[
            pl.BlockSpec((pl.Squeezed(), P, TH), lambda b, h: (b, 0, h)),  # x
            pl.BlockSpec((pl.Squeezed(), P, 2), lambda b, h: (b, 0, 0)),   # scale/shift
            pl.BlockSpec((1, TH), lambda b, h: (0, h)),                    # gamma
            pl.BlockSpec((1, TH), lambda b, h: (0, h)),                    # beta
            pl.BlockSpec((S, P), lambda b, h: (0, 0), **const),            # W1
            pl.BlockSpec((S, 1), lambda b, h: (0, 0), **const),            # b1
            pl.BlockSpec((P, S), lambda b, h: (0, 0), **const),            # W2
            pl.BlockSpec((P, 1), lambda b, h: (0, 0), **const),            # b2
        ],
        out_specs=pl.BlockSpec((pl.Squeezed(), P, TH), lambda b, h: (b, 0, h)),
    )
    out = pl.pallas_call(
        functools.partial(mlp1_tiled_kernel, **kernel_flags),
        out_shape=jax.ShapeDtypeStruct((B, P, H_pad), x.dtype),
        grid_spec=grid_spec,
        compiler_params=pltpu.CompilerParams(
            dimension_semantics=("parallel", "parallel"),
            vmem_limit_bytes=vmem_limit,
        ),
    )(xp, ss, gammap, betap, w1c, b1c, w2c, b2c)
    # Padded hidden columns contain junk (b1 propagates through GELU/fc2);
    # they are sliced off here and must never be consumed directly.
    return out if H_pad == H else out[:, :, :H]


def reference_mlp1(x, w1, b1, w2, b2, gamma, beta, off_act=False):
    """Pure-JAX reference of the PyTorch forward (NormPos='Before', eval mode)."""
    x = x.astype(jnp.float32)
    mean = jnp.mean(x, axis=-1, keepdims=True)
    var = jnp.mean((x - mean) ** 2, axis=-1, keepdims=True)
    y = (x - mean) / jnp.sqrt(var + LN_EPS) * gamma + beta
    h = jnp.einsum("sp,bph->bsh", w1, y) + b1[None, :, None]
    a = h if off_act else 0.5 * h * (1.0 + jax.lax.erf(h / math.sqrt(2.0)))
    out = jnp.einsum("ps,bsh->bph", w2, a) + b2[None, :, None]
    return out + x


if __name__ == "__main__":
    # Small shapes consistent with the module: x is (B, num_patches, hidden_size).
    B, P, H, S = 2, 8, 32, 16   # batch, num_patches, hidden_size, hidden_s
    key = jax.random.PRNGKey(0)
    kx, kw1, kb1, kw2, kb2 = jax.random.split(key, 5)

    x = jax.random.normal(kx, (B, P, H), dtype=jnp.float32)

    # Deterministic parameter init (Conv1d k=1 weights collapse to 2-D matrices).
    bound1 = 1.0 / math.sqrt(P)
    w1 = jax.random.uniform(kw1, (S, P), jnp.float32, -bound1, bound1)
    b1 = jax.random.uniform(kb1, (S,), jnp.float32, -bound1, bound1)
    bound2 = 1.0 / math.sqrt(S)
    w2 = jax.random.uniform(kw2, (P, S), jnp.float32, -bound2, bound2)
    b2 = jax.random.uniform(kb2, (P,), jnp.float32, -bound2, bound2)
    gamma = jnp.ones((H,), jnp.float32)   # nn.LayerNorm default init
    beta = jnp.zeros((H,), jnp.float32)

    # TODO(synk): dropout layers (do1/do2) are identity at inference; training-mode
    # dropout masks are not implemented in the kernel.

    ref = reference_mlp1(x, w1, b1, w2, b2, gamma, beta)

    # 1) Exact path: f32-fed MXU, fused fast path (in-kernel LayerNorm moments).
    out_f32 = jax.block_until_ready(
        mlp1_forward(x, w1, b1, w2, b2, gamma, beta, use_bf16_matmul=False))
    assert out_f32.shape == (B, P, H)
    err = float(jnp.max(jnp.abs(out_f32 - ref)))
    assert err < 1e-4, f"f32 fast path max abs err {err}"

    # 2) Default perf path: bf16-fed MXU with f32 accumulation (looser numerics).
    out_bf16 = jax.block_until_ready(mlp1_forward(x, w1, b1, w2, b2, gamma, beta))
    assert out_bf16.shape == (B, P, H)
    err = float(jnp.max(jnp.abs(out_bf16 - ref)))
    assert err < 5e-2, f"bf16 fast path max abs err {err}"

    # 3) Tiled fallback path (used for very large hidden_size), f32 numerics,
    #    exercises the H padding + output slice branch (32 -> 128).
    out_tiled = jax.block_until_ready(
        mlp1_forward(x, w1, b1, w2, b2, gamma, beta,
                     use_bf16_matmul=False, force_tiled=True))
    assert out_tiled.shape == (B, P, H)
    err = float(jnp.max(jnp.abs(out_tiled - ref)))
    assert err < 1e-4, f"f32 tiled path max abs err {err}"

    # 4) Tiled path with multiple hidden tiles (H=256, TH=128 -> grid (B, 2)).
    H2 = 256
    x2 = jax.random.normal(kx, (B, P, H2), dtype=jnp.float32)
    g2 = jnp.ones((H2,), jnp.float32)
    be2 = jnp.zeros((H2,), jnp.float32)
    ref2 = reference_mlp1(x2, w1, b1, w2, b2, g2, be2)
    out2 = jax.block_until_ready(
        mlp1_forward(x2, w1, b1, w2, b2, g2, be2, use_bf16_matmul=False,
                     force_tiled=True, max_h_tile=128))
    assert out2.shape == (B, P, H2)
    err = float(jnp.max(jnp.abs(out2 - ref2)))
    assert err < 1e-4, f"f32 multi-tile path max abs err {err}"

    print("KERNEL_OK")
</pallas_src>

<mosaic_0001>
module attributes {stable_mosaic.version = 11 : i64} {
  func.func @mlp1_fused_kernel(%arg0: i32, %arg1: memref<1x8x32xf32, #tpu.memory_space<vmem>>, %arg2: memref<1x32xf32, #tpu.memory_space<vmem>>, %arg3: memref<1x32xf32, #tpu.memory_space<vmem>>, %arg4: memref<16x8xf32, #tpu.memory_space<vmem>>, %arg5: memref<16x1xf32, #tpu.memory_space<vmem>>, %arg6: memref<8x16xf32, #tpu.memory_space<vmem>>, %arg7: memref<8x1xf32, #tpu.memory_space<vmem>>, %arg8: memref<1x8x32xf32, #tpu.memory_space<vmem>>) attributes {dimension_semantics = [#tpu.dimension_semantics<parallel>], iteration_bounds = array<i64: 2>, scalar_prefetch = 0 : i64, scratch_operands = 0 : i64, tpu.core_type = #tpu.core_type<tc>, window_params = [{transform_indices = @transform_0, window_bounds = array<i64: 1, 8, 32>}, {pipeline_mode = #tpu.pipeline_mode<synchronous>, transform_indices = @transform_1, window_bounds = array<i64: 1, 32>}, {pipeline_mode = #tpu.pipeline_mode<synchronous>, transform_indices = @transform_2, window_bounds = array<i64: 1, 32>}, {pipeline_mode = #tpu.pipeline_mode<synchronous>, transform_indices = @transform_3, window_bounds = array<i64: 16, 8>}, {pipeline_mode = #tpu.pipeline_mode<synchronous>, transform_indices = @transform_4, window_bounds = array<i64: 16, 1>}, {pipeline_mode = #tpu.pipeline_mode<synchronous>, transform_indices = @transform_5, window_bounds = array<i64: 8, 16>}, {pipeline_mode = #tpu.pipeline_mode<synchronous>, transform_indices = @transform_6, window_bounds = array<i64: 8, 1>}, {transform_indices = @transform_7, window_bounds = array<i64: 1, 8, 32>}]} {
    %c0 = arith.constant 0 : index
    %c0_0 = arith.constant 0 : index
    %0 = vector.load %arg2[%c0, %c0_0] : memref<1x32xf32, #tpu.memory_space<vmem>>, vector<1x32xf32>
    %c0_1 = arith.constant 0 : index
    %c0_2 = arith.constant 0 : index
    %1 = vector.load %arg3[%c0_1, %c0_2] : memref<1x32xf32, #tpu.memory_space<vmem>>, vector<1x32xf32>
    %c0_3 = arith.constant 0 : index
    %c0_4 = arith.constant 0 : index
    %2 = vector.load %arg4[%c0_3, %c0_4] : memref<16x8xf32, #tpu.memory_space<vmem>>, vector<16x8xf32>
    %c0_5 = arith.constant 0 : index
    %c0_6 = arith.constant 0 : index
    %3 = vector.load %arg5[%c0_5, %c0_6] : memref<16x1xf32, #tpu.memory_space<vmem>>, vector<16x1xf32>
    %c0_7 = arith.constant 0 : index
    %c0_8 = arith.constant 0 : index
    %4 = vector.load %arg6[%c0_7, %c0_8] : memref<8x16xf32, #tpu.memory_space<vmem>>, vector<8x16xf32>
    %c0_9 = arith.constant 0 : index
    %c0_10 = arith.constant 0 : index
    %5 = vector.load %arg7[%c0_9, %c0_10] : memref<8x1xf32, #tpu.memory_space<vmem>>, vector<8x1xf32>
    %c0_11 = arith.constant 0 : index
    %c0_12 = arith.constant 0 : index
    %c0_13 = arith.constant 0 : index
    %6 = vector.load %arg1[%c0_11, %c0_12, %c0_13] : memref<1x8x32xf32, #tpu.memory_space<vmem>>, vector<1x8x32xf32>
    %7 = vector.shape_cast %6 : vector<1x8x32xf32> to vector<8x32xf32>
    %cst = arith.constant dense<0.000000e+00> : vector<8xf32>
    %8 = vector.multi_reduction <add>, %7, %cst [1] : vector<8x32xf32> to vector<8xf32>
    %9 = vector.shape_cast %8 : vector<8xf32> to vector<8x1xf32>
    %cst_14 = arith.constant 3.200000e+01 : f32
    %10 = vector.broadcast %cst_14 : f32 to vector<8x1xf32>
    %11 = arith.divf %9, %10 : vector<8x1xf32>
    %12 = vector.broadcast %11 : vector<8x1xf32> to vector<8x32xf32>
    %13 = arith.subf %7, %12 : vector<8x32xf32>
    %14 = arith.mulf %13, %13 : vector<8x32xf32>
    %cst_15 = arith.constant dense<0.000000e+00> : vector<8xf32>
    %15 = vector.multi_reduction <add>, %14, %cst_15 [1] : vector<8x32xf32> to vector<8xf32>
    %16 = vector.shape_cast %15 : vector<8xf32> to vector<8x1xf32>
    %cst_16 = arith.constant 3.200000e+01 : f32
    %17 = vector.broadcast %cst_16 : f32 to vector<8x1xf32>
    %18 = arith.divf %16, %17 : vector<8x1xf32>
    %cst_17 = arith.constant 9.99999974E-6 : f32
    %19 = vector.broadcast %cst_17 : f32 to vector<8x1xf32>
    %20 = arith.addf %18, %19 : vector<8x1xf32>
    %21 = math.rsqrt %20 : vector<8x1xf32>
    %22 = vector.broadcast %11 : vector<8x1xf32> to vector<8x32xf32>
    %23 = arith.subf %7, %22 : vector<8x32xf32>
    %24 = vector.broadcast %21 : vector<8x1xf32> to vector<8x32xf32>
    %25 = arith.mulf %23, %24 : vector<8x32xf32>
    %26 = vector.broadcast %0 : vector<1x32xf32> to vector<8x32xf32>
    %27 = arith.mulf %25, %26 : vector<8x32xf32>
    %28 = vector.broadcast %1 : vector<1x32xf32> to vector<8x32xf32>
    %29 = arith.addf %27, %28 : vector<8x32xf32>
    %cst_18 = arith.constant dense<0.000000e+00> : vector<16x32xf32>
    %30 = tpu.matmul %2, %29, %cst_18 {dimension_numbers = #tpu.dot_dimension_numbers<[1], [0], [0], [1], [0, 0, 1, 1], [], []>} : vector<16x8xf32>, vector<8x32xf32>, vector<16x32xf32> -> vector<16x32xf32>
    %31 = vector.broadcast %3 : vector<16x1xf32> to vector<16x32xf32>
    %32 = arith.addf %30, %31 : vector<16x32xf32>
    %cst_19 = arith.constant 5.000000e-01 : f32
    %33 = vector.broadcast %cst_19 : f32 to vector<16x32xf32>
    %34 = arith.mulf %33, %32 : vector<16x32xf32>
    %cst_20 = arith.constant 0.707106769 : f32
    %35 = vector.broadcast %cst_20 : f32 to vector<16x32xf32>
    %36 = arith.mulf %32, %35 : vector<16x32xf32>
    %37 = math.erf %36 : vector<16x32xf32>
    %cst_21 = arith.constant 1.000000e+00 : f32
    %38 = vector.broadcast %cst_21 : f32 to vector<16x32xf32>
    %39 = arith.addf %38, %37 : vector<16x32xf32>
    %40 = arith.mulf %34, %39 : vector<16x32xf32>
    %cst_22 = arith.constant dense<0.000000e+00> : vector<8x32xf32>
    %41 = tpu.matmul %4, %40, %cst_22 {dimension_numbers = #tpu.dot_dimension_numbers<[1], [0], [0], [1], [0, 0, 1, 1], [], []>} : vector<8x16xf32>, vector<16x32xf32>, vector<8x32xf32> -> vector<8x32xf32>
    %42 = vector.broadcast %5 : vector<8x1xf32> to vector<8x32xf32>
    %43 = arith.addf %41, %42 : vector<8x32xf32>
    %44 = arith.addf %43, %7 : vector<8x32xf32>
    %c0_23 = arith.constant 0 : index
    %c0_24 = arith.constant 0 : index
    %c0_25 = arith.constant 0 : index
    %45 = vector.load %arg8[%c0_23, %c0_24, %c0_25] : memref<1x8x32xf32, #tpu.memory_space<vmem>>, vector<1x8x32xf32>
    %46 = vector.shape_cast %45 : vector<1x8x32xf32> to vector<8x32xf32>
    %47 = vector.shape_cast %44 : vector<8x32xf32> to vector<1x8x32xf32>
    tpu.vector_store %arg8[%c0_23, %c0_24, %c0_25], %47 {strides = array<i32>} : memref<1x8x32xf32, #tpu.memory_space<vmem>>, vector<1x8x32xf32>,
    return
  }
  func.func @transform_0(%arg0: i32) -> (i32, i32, i32) {
    %c0_i32 = arith.constant 0 : i32
    %c0_i32_0 = arith.constant 0 : i32
    %c0_i32_1 = arith.constant 0 : i32
    return %arg0, %c0_i32, %c0_i32_0 : i32, i32, i32
  }
  func.func @transform_1(%arg0: i32) -> (i32, i32) {
    %c0_i32 = arith.constant 0 : i32
    %c0_i32_0 = arith.constant 0 : i32
    %c0_i32_1 = arith.constant 0 : i32
    return %c0_i32, %c0_i32_0 : i32, i32
  }
  func.func @transform_2(%arg0: i32) -> (i32, i32) {
    %c0_i32 = arith.constant 0 : i32
    %c0_i32_0 = arith.constant 0 : i32
    %c0_i32_1 = arith.constant 0 : i32
    return %c0_i32, %c0_i32_0 : i32, i32
  }
  func.func @transform_3(%arg0: i32) -> (i32, i32) {
    %c0_i32 = arith.constant 0 : i32
    %c0_i32_0 = arith.constant 0 : i32
    %c0_i32_1 = arith.constant 0 : i32
    return %c0_i32, %c0_i32_0 : i32, i32
  }
  func.func @transform_4(%arg0: i32) -> (i32, i32) {
    %c0_i32 = arith.constant 0 : i32
    %c0_i32_0 = arith.constant 0 : i32
    %c0_i32_1 = arith.constant 0 : i32
    return %c0_i32, %c0_i32_0 : i32, i32
  }
  func.func @transform_5(%arg0: i32) -> (i32, i32) {
    %c0_i32 = arith.constant 0 : i32
    %c0_i32_0 = arith.constant 0 : i32
    %c0_i32_1 = arith.constant 0 : i32
    return %c0_i32, %c0_i32_0 : i32, i32
  }
  func.func @transform_6(%arg0: i32) -> (i32, i32) {
    %c0_i32 = arith.constant 0 : i32
    %c0_i32_0 = arith.constant 0 : i32
    %c0_i32_1 = arith.constant 0 : i32
    return %c0_i32, %c0_i32_0 : i32, i32
  }
  func.func @transform_7(%arg0: i32) -> (i32, i32, i32) {
    %c0_i32 = arith.constant 0 : i32
    %c0_i32_0 = arith.constant 0 : i32
    %c0_i32_1 = arith.constant 0 : i32
    return %arg0, %c0_i32, %c0_i32_0 : i32, i32, i32
  }
}

</mosaic_0001>

<llo_original>
// kernel: mlp1_forward.1
$region0: #{mlp1_forward.1}
  #allocation0 [shape = 'u32[]', space=smem, size = 0x4, offset = 0x4, fixed_abs, tag = 'smem constant byte address 0x4 - core index']
  #allocation1 [shape = 'u32[144,128]{1,0:T(1,128)}', space=vmem, size = 0x12000, scoped, tag = 'internal scratch']
  %s0 = inlined_call_operand.vmem [shape: f32[2,8,32], index: 0, kind: input, shape index: {}]
  %s1 = inlined_call_operand.vmem [shape: f32[1,32], index: 1, kind: input, shape index: {}]
  %s2 = inlined_call_operand.vmem [shape: f32[1,32], index: 2, kind: input, shape index: {}]
  %s3 = inlined_call_operand.vmem [shape: f32[16,8], index: 3, kind: input, shape index: {}]
  %s4 = inlined_call_operand.vmem [shape: f32[16,1], index: 4, kind: input, shape index: {}]
  %s5 = inlined_call_operand.vmem [shape: f32[8,16], index: 5, kind: input, shape index: {}]
  %s6 = inlined_call_operand.vmem [shape: f32[8,1], index: 6, kind: input, shape index: {}]
  %s7 = inlined_call_operand.hbm [shape: f32[2,8,32], index: 7, kind: output, shape index: {}]
  %s8 = sld [smem:[#allocation0]]
  $region61: #{mlp1_forward.1} parent=0
    _
  %s10 = ssub.s32 1, %s8
  %s11 = scalar_select 0, %s10, %s8
  $region1: #{mlp1_forward.1} parent=0
    #allocation2 [shape = 'u8[8192]{0}', space=vmem, size = 0x2000, scoped, tag = 'output window, operand 0']
    #allocation3 [shape = 's32[2]{0}', space=sflag, size = 0x8, scoped, tag = 'scoped memory for mlp1_forward.1']
    %12 = vsyncpa [#allocation3], 0
    %s13 = scalar_lea.sflag [#allocation3], 1
    %14 = vsyncpa %s13, 0
    loop: start=0, step=1, limit=4
    $region2: #{mlp1_forward.1} parent=1 // loop_pre_header
      _
    $region3: #{mlp1_forward.1} parent=1 // loop_header
      %s16 = sphi 0, %s20
      %p17 = scmp.ge.s32.totalorder %s16, 4
      %s26 = sphi 0, %s28
      %s29 = sphi 0, %s26
      %s30 = sphi 0, %s29
      %s46 = sphi 0, %s30
      %s50 = sphi 0, %s50
      %s52 = sphi 0, %s50
      %s53 = sphi 0, %s52
      %s67 = sphi 0, %s53
      %s71 = sphi 0, %s71
      %s73 = sphi 0, %s71
      %s74 = sphi 0, %s73
      %s88 = sphi 0, %s74
      %s92 = sphi 0, %s92
      %s94 = sphi 0, %s92
      %s95 = sphi 0, %s94
      %s109 = sphi 0, %s95
      %s113 = sphi 0, %s113
      %s115 = sphi 0, %s113
      %s116 = sphi 0, %s115
      %s130 = sphi 0, %s116
      %s134 = sphi 0, %s134
      %s136 = sphi 0, %s134
      %s137 = sphi 0, %s136
      %s151 = sphi 0, %s137
      %s155 = sphi 0, %s155
      %s157 = sphi 0, %s155
      %s158 = sphi 0, %s157
      %s172 = sphi 0, %s158
      %s178 = sphi 0, %s180
      %s181 = sphi 0, %s178
      %s182 = sphi 0, %s181
      %s198 = sphi 0, %s182
    $region4: #{mlp1_forward.1} parent=1 // loop_header_branch
      %19 = sbr.rel (%p17) target = $region8
    $region5: #{mlp1_forward.1} parent=1 // loop_body
      %s21 = ssub.s32 %s16, 1
      %s22 = ssub.s32 %s16, 2
      %s23 = sadd.s32 %s16, 1
      %s24 = ssub.s32 %s16, %s23
      %p25 = scmp.eq.s32.totalorder %s24, 0
      %s27 = sadd.s32 %s26, 1
      %s28 = scalar_select %p25, %s26, %s27
      %p31 = pneg %p25
      %p32 = scmp.eq.s32.totalorder %s16, 1
      %p33 = por %p31, %p32
      %p34 = scmp.ne.s32.totalorder %s26, %s29
      %p35 = scmp.eq.s32.totalorder %s16, 0
      %p36 = por %p34, %p35
      %p37 = scmp.ne.s32.totalorder %s26, %s29
      %p38 = scmp.eq.s32.totalorder %s21, 1
      %p39 = por %p37, %p38
      %p40 = scmp.ne.s32.totalorder %s29, %s30
      %p41 = scmp.eq.s32.totalorder %s21, 0
      %p42 = por %p40, %p41
      %p43 = scmp.ne.s32.totalorder %s29, %s30
      %p44 = scmp.eq.s32.totalorder %s22, 1
      %p45 = por %p43, %p44
      %p47 = scmp.ne.s32.totalorder %s30, %s46
      %p48 = scmp.eq.s32.totalorder %s22, 0
      %p49 = por %p47, %p48
      %s51 = sadd.s32 %s50, 1
      %p54 = scmp.eq.s32.totalorder %s16, 1
      %p55 = scmp.ne.s32.totalorder %s50, %s52
      %p56 = scmp.eq.s32.totalorder %s16, 0
      %p57 = por %p55, %p56
      %p58 = scmp.ne.s32.totalorder %s50, %s52
      %p59 = scmp.eq.s32.totalorder %s21, 1
      %p60 = por %p58, %p59
      %p61 = scmp.ne.s32.totalorder %s52, %s53
      %p62 = scmp.eq.s32.totalorder %s21, 0
      %p63 = por %p61, %p62
      %p64 = scmp.ne.s32.totalorder %s52, %s53
      %p65 = scmp.eq.s32.totalorder %s22, 1
      %p66 = por %p64, %p65
      %p68 = scmp.ne.s32.totalorder %s53, %s67
      %p69 = scmp.eq.s32.totalorder %s22, 0
      %p70 = por %p68, %p69
      %s72 = sadd.s32 %s71, 1
      %p75 = scmp.eq.s32.totalorder %s16, 1
      %p76 = scmp.ne.s32.totalorder %s71, %s73
      %p77 = scmp.eq.s32.totalorder %s16, 0
      %p78 = por %p76, %p77
      %p79 = scmp.ne.s32.totalorder %s71, %s73
      %p80 = scmp.eq.s32.totalorder %s21, 1
      %p81 = por %p79, %p80
      %p82 = scmp.ne.s32.totalorder %s73, %s74
      %p83 = scmp.eq.s32.totalorder %s21, 0
      %p84 = por %p82, %p83
      %p85 = scmp.ne.s32.totalorder %s73, %s74
      %p86 = scmp.eq.s32.totalorder %s22, 1
      %p87 = por %p85, %p86
      %p89 = scmp.ne.s32.totalorder %s74, %s88
      %p90 = scmp.eq.s32.totalorder %s22, 0
      %p91 = por %p89, %p90
      %s93 = sadd.s32 %s92, 1
      %p96 = scmp.eq.s32.totalorder %s16, 1
      %p97 = scmp.ne.s32.totalorder %s92, %s94
      %p98 = scmp.eq.s32.totalorder %s16, 0
      %p99 = por %p97, %p98
      %p100 = scmp.ne.s32.totalorder %s92, %s94
      %p101 = scmp.eq.s32.totalorder %s21, 1
      %p102 = por %p100, %p101
      %p103 = scmp.ne.s32.totalorder %s94, %s95
      %p104 = scmp.eq.s32.totalorder %s21, 0
      %p105 = por %p103, %p104
      %p106 = scmp.ne.s32.totalorder %s94, %s95
      %p107 = scmp.eq.s32.totalorder %s22, 1
      %p108 = por %p106, %p107
      %p110 = scmp.ne.s32.totalorder %s95, %s109
      %p111 = scmp.eq.s32.totalorder %s22, 0
      %p112 = por %p110, %p111
      %s114 = sadd.s32 %s113, 1
      %p117 = scmp.eq.s32.totalorder %s16, 1
      %p118 = scmp.ne.s32.totalorder %s113, %s115
      %p119 = scmp.eq.s32.totalorder %s16, 0
      %p120 = por %p118, %p119
      %p121 = scmp.ne.s32.totalorder %s113, %s115
      %p122 = scmp.eq.s32.totalorder %s21, 1
      %p123 = por %p121, %p122
      %p124 = scmp.ne.s32.totalorder %s115, %s116
      %p125 = scmp.eq.s32.totalorder %s21, 0
      %p126 = por %p124, %p125
      %p127 = scmp.ne.s32.totalorder %s115, %s116
      %p128 = scmp.eq.s32.totalorder %s22, 1
      %p129 = por %p127, %p128
      %p131 = scmp.ne.s32.totalorder %s116, %s130
      %p132 = scmp.eq.s32.totalorder %s22, 0
      %p133 = por %p131, %p132
      %s135 = sadd.s32 %s134, 1
      %p138 = scmp.eq.s32.totalorder %s16, 1
      %p139 = scmp.ne.s32.totalorder %s134, %s136
      %p140 = scmp.eq.s32.totalorder %s16, 0
      %p141 = por %p139, %p140
      %p142 = scmp.ne.s32.totalorder %s134, %s136
      %p143 = scmp.eq.s32.totalorder %s21, 1
      %p144 = por %p142, %p143
      %p145 = scmp.ne.s32.totalorder %s136, %s137
      %p146 = scmp.eq.s32.totalorder %s21, 0
      %p147 = por %p145, %p146
      %p148 = scmp.ne.s32.totalorder %s136, %s137
      %p149 = scmp.eq.s32.totalorder %s22, 1
      %p150 = por %p148, %p149
      %p152 = scmp.ne.s32.totalorder %s137, %s151
      %p153 = scmp.eq.s32.totalorder %s22, 0
      %p154 = por %p152, %p153
      %s156 = sadd.s32 %s155, 1
      %p159 = scmp.eq.s32.totalorder %s16, 1
      %p160 = scmp.ne.s32.totalorder %s155, %s157
      %p161 = scmp.eq.s32.totalorder %s16, 0
      %p162 = por %p160, %p161
      %p163 = scmp.ne.s32.totalorder %s155, %s157
      %p164 = scmp.eq.s32.totalorder %s21, 1
      %p165 = por %p163, %p164
      %p166 = scmp.ne.s32.totalorder %s157, %s158
      %p167 = scmp.eq.s32.totalorder %s21, 0
      %p168 = por %p166, %p167
      %p169 = scmp.ne.s32.totalorder %s157, %s158
      %p170 = scmp.eq.s32.totalorder %s22, 1
      %p171 = por %p169, %p170
      %p173 = scmp.ne.s32.totalorder %s158, %s172
      %p174 = scmp.eq.s32.totalorder %s22, 0
      %p175 = por %p173, %p174
      %s176 = ssub.s32 %s16, %s23
      %p177 = scmp.eq.s32.totalorder %s176, 0
      %s179 = sadd.s32 %s178, 1
      %s180 = scalar_select %p177, %s178, %s179
      %p183 = pneg %p177
      %p184 = scmp.eq.s32.totalorder %s16, 1
      %p185 = por %p183, %p184
      %p186 = scmp.ne.s32.totalorder %s178, %s181
      %p187 = scmp.eq.s32.totalorder %s16, 0
      %p188 = por %p186, %p187
      %p189 = scmp.ne.s32.totalorder %s178, %s181
      %p190 = scmp.eq.s32.totalorder %s21, 1
      %p191 = por %p189, %p190
      %p192 = scmp.ne.s32.totalorder %s181, %s182
      %p193 = scmp.eq.s32.totalorder %s21, 0
      %p194 = por %p192, %p193
      %p195 = scmp.ne.s32.totalorder %s181, %s182
      %p196 = scmp.eq.s32.totalorder %s22, 1
      %p197 = por %p195, %p196
      %p199 = scmp.ne.s32.totalorder %s182, %s198
      %p200 = scmp.eq.s32.totalorder %s22, 0
      %p201 = por %p199, %p200
      %p202 = scmp.le.s32.totalorder 1, %s16
      %p203 = scmp.lt.s32.totalorder %s16, 3
      %p204 = pnand %p202, %p203
      %p205 = pneg %p204
      // Predicated region
      $region9: #{mlp1_forward.1} parent=5 // pred_check
        _
      $region10: #{mlp1_forward.1} parent=5 // pred_check_branch
        %207 = sbr.rel (%p204) target = $region12
      $region11: #{mlp1_forward.1} parent=5 // pred_region
        %s208 = ssub.s32 %s16, 1
        // Predicated region
        $region13: #{mlp1_forward.1} parent=11 // pred_check
          %p209 = pneg %p63
        $region14: #{mlp1_forward.1} parent=11 // pred_check_branch
          %211 = sbr.rel (%p209) target = $region16
        $region15: #{mlp1_forward.1} parent=11 // pred_region
          _
        $region16: #{mlp1_forward.1} parent=11 // pred_fallthru
          _
        // Predicated region
        $region17: #{mlp1_forward.1} parent=11 // pred_check
          %p212 = pneg %p84
        $region18: #{mlp1_forward.1} parent=11 // pred_check_branch
          %214 = sbr.rel (%p212) target = $region20
        $region19: #{mlp1_forward.1} parent=11 // pred_region
          _
        $region20: #{mlp1_forward.1} parent=11 // pred_fallthru
          _
        // Predicated region
        $region21: #{mlp1_forward.1} parent=11 // pred_check
          %p215 = pneg %p105
        $region22: #{mlp1_forward.1} parent=11 // pred_check_branch
          %217 = sbr.rel (%p215) target = $region24
        $region23: #{mlp1_forward.1} parent=11 // pred_region
          _
        $region24: #{mlp1_forward.1} parent=11 // pred_fallthru
          _
        // Predicated region
        $region25: #{mlp1_forward.1} parent=11 // pred_check
          %p218 = pneg %p126
        $region26: #{mlp1_forward.1} parent=11 // pred_check_branch
          %220 = sbr.rel (%p218) target = $region28
        $region27: #{mlp1_forward.1} parent=11 // pred_region
          _
        $region28: #{mlp1_forward.1} parent=11 // pred_fallthru
          _
        // Predicated region
        $region29: #{mlp1_forward.1} parent=11 // pred_check
          %p221 = pneg %p147
        $region30: #{mlp1_forward.1} parent=11 // pred_check_branch
          %223 = sbr.rel (%p221) target = $region32
        $region31: #{mlp1_forward.1} parent=11 // pred_region
          _
        $region32: #{mlp1_forward.1} parent=11 // pred_fallthru
          _
        // Predicated region
        $region33: #{mlp1_forward.1} parent=11 // pred_check
          %p224 = pneg %p168
        $region34: #{mlp1_forward.1} parent=11 // pred_check_branch
          %226 = sbr.rel (%p224) target = $region36
        $region35: #{mlp1_forward.1} parent=11 // pred_region
          _
        $region36: #{mlp1_forward.1} parent=11 // pred_fallthru
          _
      $region12: #{mlp1_forward.1} parent=5 // pred_fallthru
        _
      %p227 = scmp.lt.s32.totalorder %s16, 2
      // Predicated region
      $region37: #{mlp1_forward.1} parent=5 // pred_check
        %p228 = pneg %p227
      $region38: #{mlp1_forward.1} parent=5 // pred_check_branch
        %230 = sbr.rel (%p228) target = $region40
      $region39: #{mlp1_forward.1} parent=5 // pred_region
        // Predicated region
        $region41: #{mlp1_forward.1} parent=39 // pred_check
          %p231 = pneg %p36
        $region42: #{mlp1_forward.1} parent=39 // pred_check_branch
          %233 = sbr.rel (%p231) target = $region44
        $region43: #{mlp1_forward.1} parent=39 // pred_region
          %p234 = scmp.lt.s32.totalorder %s16, 1
          %s235 = scalar_select %p234, %s16, 1
          %s236 = smul.addr %s235, 8
          %s237 = scalar_lea.vmem %s0, %s236
        $region44: #{mlp1_forward.1} parent=39 // pred_fallthru
          _
      $region40: #{mlp1_forward.1} parent=5 // pred_fallthru
        _
      %p238 = scmp.le.s32.totalorder 1, %s16
      %p239 = scmp.lt.s32.totalorder %s16, 3
      %p240 = pnand %p238, %p239
      %p241 = pneg %p240
      // Predicated region
      $region45: #{mlp1_forward.1} parent=5 // pred_check
        _
      $region46: #{mlp1_forward.1} parent=5 // pred_check_branch
        %243 = sbr.rel (%p240) target = $region48
      $region47: #{mlp1_forward.1} parent=5 // pred_region
        %s244 = ssub.s32 %s16, 1
        %p245 = scmp.lt.s32.totalorder %s21, 1
        %s246 = scalar_select %p245, %s21, 1
        %s247 = smul.addr %s246, 8
        %s248 = scalar_lea.vmem %s0, %s247
        %p249 = pneg %p42
        %p250 = pneg %p39
        %p251 = pneg %p63
        %p252 = pneg %p60
        %p253 = pneg %p84
        %p254 = pneg %p81
        %p255 = pneg %p105
        %p256 = pneg %p102
        %p257 = pneg %p126
        %p258 = pneg %p123
        %p259 = pneg %p147
        %p260 = pneg %p144
        %p261 = pneg %p168
        %p262 = pneg %p165
        %p263 = pneg %p194
        %p264 = pneg %p191
        %s265 = sand.u32 %s181, 1
        %s266 = scalar_lea.sflag [#allocation3], %s265
        %s267 = sand.u32 %s181, 1
        %s268 = smul.addr %s267, 8
        %s269 = scalar_lea.vmem [#allocation2], %s268
        %p270 = scmp.lt.s32.totalorder %s21, 1
        %s271 = scalar_select %p270, %s21, 1
        %s272 = smul.addr %s271, 8
        %s273 = scalar_lea.vmem %s0, %s272
        %v274 = vld [vmem:[%s1] sm:$0x1]
        %v275 = vld [vmem:[%s2] sm:$0x1]
        %v276 = vld [vmem:[%s3] sm:$0xff]
        %v277 = vld [vmem:[%s3 + $0x8] sm:$0xff]
        %v278 = vld [vmem:[%s4] sm:$0xff]
        %v279 = vld [vmem:[%s4 + $0x8] sm:$0xff]
        %v280 = vld [vmem:[%s5] sm:$0xff]
        %v281 = vld [vmem:[%s6] sm:$0xff]
        %v282 = vld [vmem:[%s273] sm:$0xff]
        %vm283 = vcmask 261120
        %v284 = vsel %vm283, %v282, 0.0
        %285 = vadd.xlane.f32.xlu0 %v284
        %v286 = vpop.xlane.xlu0 %285
        %v287 = vrcp.pop 32.0
        %v288 = vmul.f32 %v286, %v287
        %v289 = vsub.f32 %v282, %v288
        %v290 = vmul.f32 %v289, %v289
        %v291 = vsel %vm283, %v290, 0.0
        %292 = vadd.xlane.f32.xlu0 %v291
        %v293 = vpop.xlane.xlu0 %292
        %v294 = vmul.f32 %v293, %v287
        %v295 = vadd.f32 %v294, 1e-05
        %v296 = vrsqrt.pop %v295
        %v297 = vmul.f32 %v289, %v296
        %v299 = vlaneseq
        %v300 = vshrl.u32 %v299, 7
        %v301 = vsub.s32 0, %v300
        %v302 = vrot.slane %v274, %v301
        %v304 = vmul.f32 %v297, %v302
        %v306 = vlaneseq
        %v307 = vshrl.u32 %v306, 7
        %v308 = vsub.s32 0, %v307
        %v309 = vrot.slane %v275, %v308
        %v311 = vadd.f32 %v304, %v309
        %313 = vset.pattern.permute.xlu0 0
        %314 = vperm.xlu0 %313, %v278
        %v315 = vpop.permute.xlu0 %314
        %318 = vset.pattern.permute.xlu0 0
        %319 = vperm.xlu0 %318, %v279
        %v320 = vpop.permute.xlu0 %319
        %vm322 = vcmask 64512
        %v324 = vsel %vm322, %v276, 0
        %v327 = vsel %vm322, %v277, 0
        %329 = vmatprep.subr.mxu0 0.0
        %330 = vmatpush1.msra.mxu0 %v311
        %331 = vmatprep.subr.mxu0 0.0
        %332 = vmatpush1.msra.mxu0 0.0
        %333 = vmatprep.subr.mxu0 0.0
        %334 = vmatpush1.msra.mxu0 0.0
        %335 = vmatprep.subr.mxu0 0.0
        %336 = vmatpush1.msra.mxu0 0.0
        %337 = vmatprep.subr.mxu0 0.0
        %338 = vmatpush1.msra.mxu0 0.0
        %339 = vmatprep.subr.mxu0 0.0
        %340 = vmatpush1.msra.mxu0 0.0
        %341 = vmatprep.subr.mxu0 0.0
        %342 = vmatpush1.msra.mxu0 0.0
        %343 = vmatprep.subr.mxu0 0.0
        %344 = vmatpush1.msra.mxu0 0.0
        %345 = vmatprep.subr.mxu0 0.0
        %346 = vmatpush1.msra.mxu0 0.0
        %347 = vmatprep.subr.mxu0 0.0
        %348 = vmatpush1.msra.mxu0 0.0
        %349 = vmatprep.subr.mxu0 0.0
        %350 = vmatpush1.msra.mxu0 0.0
        %351 = vmatprep.subr.mxu0 0.0
        %352 = vmatpush1.msra.mxu0 0.0
        %353 = vmatprep.subr.mxu0 0.0
        %354 = vmatpush1.msra.mxu0 0.0
        %355 = vmatprep.subr.mxu0 0.0
        %356 = vmatpush1.msra.mxu0 0.0
        %357 = vmatprep.subr.mxu0 0.0
        %358 = vmatpush1.msra.mxu0 0.0
        %359 = vmatprep.subr.mxu0 0.0
        %360 = vmatpush1.msra.mxu0 0.0
        %361 = vmatprep.subr.mxu0 0.0
        %362 = vmatpush1.msra.mxu0 0.0
        %363 = vmatprep.subr.mxu0 0.0
        %364 = vmatpush1.msra.mxu0 0.0
        %365 = vmatprep.subr.mxu0 0.0
        %366 = vmatpush1.msra.mxu0 0.0
        %367 = vmatprep.subr.mxu0 0.0
        %368 = vmatpush1.msra.mxu0 0.0
        %369 = vmatprep.subr.mxu0 0.0
        %370 = vmatpush1.msra.mxu0 0.0
        %371 = vmatprep.subr.mxu0 0.0
        %372 = vmatpush1.msra.mxu0 0.0
        %373 = vmatprep.subr.mxu0 0.0
        %374 = vmatpush1.msra.mxu0 0.0
        %375 = vmatprep.subr.mxu0 0.0
        %376 = vmatpush1.msra.mxu0 0.0
        %377 = vmatprep.subr.mxu0 0.0
        %378 = vmatpush1.msra.mxu0 0.0
        %379 = vmatprep.subr.mxu0 0.0
        %380 = vmatpush1.msra.mxu0 0.0
        %381 = vmatprep.subr.mxu0 0.0
        %382 = vmatpush1.msra.mxu0 0.0
        %383 = vmatprep.subr.mxu0 0.0
        %384 = vmatpush1.msra.mxu0 0.0
        %385 = vmatprep.subr.mxu0 0.0
        %386 = vmatpush1.msra.mxu0 0.0
        %387 = vmatprep.subr.mxu0 0.0
        %388 = vmatpush1.msra.mxu0 0.0
        %389 = vmatprep.subr.mxu0 0.0
        %390 = vmatpush1.msra.mxu0 0.0
        %391 = vmatprep.subr.mxu0 0.0
        %392 = vmatpush1.msra.mxu0 0.0
        %393 = vmatprep.mubr.f32.mxu0 0.0
        %394 = vmatmul.mubr.f32.gmra.mrb[0].mxu0 %v324
        %v395 = vpop.f32.mrb[0].mxu0
        %v396 = vadd.f32 %v315, %v395
        %v397 = vpop.f32.mrb[0].mxu0
        %398 = vmatprep.mubr.f32.mxu0 0.0
        %399 = vmatmul.mubr.f32.gmra.mrb[0].mxu0 %v327
        %v400 = vpop.f32.mrb[0].mxu0
        %v401 = vadd.f32 %v320, %v400
        %v402 = vpop.f32.mrb[0].mxu0
        %403 = vdwg.mxu0
        %v404 = vmul.f32 %v396, 0.5
        %v405 = vmul.f32 %v401, 0.5
        %v406 = vmul.f32 %v396, 0.70710677
        %v407 = vmul.f32 %v401, 0.70710677
        %v408 = verf.f32.pop %v406
        %v409 = verf.f32.pop %v407
        %v410 = vadd.f32 %v408, 1.0
        %v411 = vadd.f32 %v409, 1.0
        %v412 = vmul.f32 %v404, %v410
        %v413 = vmul.f32 %v405, %v411
        %415 = vset.pattern.permute.xlu0 0
        %416 = vperm.xlu0 %415, %v281
        %v417 = vpop.permute.xlu0 %416
        %vm419 = vcmask 130048
        %v421 = vsel %vm419, %v280, 0
        %423 = vmatprep.subr.mxu0 0.0
        %424 = vmatpush1.msra.mxu0 %v412
        %425 = vmatprep.subr.mxu0 0.0
        %426 = vmatpush1.msra.mxu0 %v413
        %427 = vmatprep.subr.mxu0 0.0
        %428 = vmatpush1.msra.mxu0 0.0
        %429 = vmatprep.subr.mxu0 0.0
        %430 = vmatpush1.msra.mxu0 0.0
        %431 = vmatprep.subr.mxu0 0.0
        %432 = vmatpush1.msra.mxu0 0.0
        %433 = vmatprep.subr.mxu0 0.0
        %434 = vmatpush1.msra.mxu0 0.0
        %435 = vmatprep.subr.mxu0 0.0
        %436 = vmatpush1.msra.mxu0 0.0
        %437 = vmatprep.subr.mxu0 0.0
        %438 = vmatpush1.msra.mxu0 0.0
        %439 = vmatprep.subr.mxu0 0.0
        %440 = vmatpush1.msra.mxu0 0.0
        %441 = vmatprep.subr.mxu0 0.0
        %442 = vmatpush1.msra.mxu0 0.0
        %443 = vmatprep.subr.mxu0 0.0
        %444 = vmatpush1.msra.mxu0 0.0
        %445 = vmatprep.subr.mxu0 0.0
        %446 = vmatpush1.msra.mxu0 0.0
        %447 = vmatprep.subr.mxu0 0.0
        %448 = vmatpush1.msra.mxu0 0.0
        %449 = vmatprep.subr.mxu0 0.0
        %450 = vmatpush1.msra.mxu0 0.0
        %451 = vmatprep.subr.mxu0 0.0
        %452 = vmatpush1.msra.mxu0 0.0
        %453 = vmatprep.subr.mxu0 0.0
        %454 = vmatpush1.msra.mxu0 0.0
        %455 = vmatprep.subr.mxu0 0.0
        %456 = vmatpush1.msra.mxu0 0.0
        %457 = vmatprep.subr.mxu0 0.0
        %458 = vmatpush1.msra.mxu0 0.0
        %459 = vmatprep.subr.mxu0 0.0
        %460 = vmatpush1.msra.mxu0 0.0
        %461 = vmatprep.subr.mxu0 0.0
        %462 = vmatpush1.msra.mxu0 0.0
        %463 = vmatprep.subr.mxu0 0.0
        %464 = vmatpush1.msra.mxu0 0.0
        %465 = vmatprep.subr.mxu0 0.0
        %466 = vmatpush1.msra.mxu0 0.0
        %467 = vmatprep.subr.mxu0 0.0
        %468 = vmatpush1.msra.mxu0 0.0
        %469 = vmatprep.subr.mxu0 0.0
        %470 = vmatpush1.msra.mxu0 0.0
        %471 = vmatprep.subr.mxu0 0.0
        %472 = vmatpush1.msra.mxu0 0.0
        %473 = vmatprep.subr.mxu0 0.0
        %474 = vmatpush1.msra.mxu0 0.0
        %475 = vmatprep.subr.mxu0 0.0
        %476 = vmatpush1.msra.mxu0 0.0
        %477 = vmatprep.subr.mxu0 0.0
        %478 = vmatpush1.msra.mxu0 0.0
        %479 = vmatprep.subr.mxu0 0.0
        %480 = vmatpush1.msra.mxu0 0.0
        %481 = vmatprep.subr.mxu0 0.0
        %482 = vmatpush1.msra.mxu0 0.0
        %483 = vmatprep.subr.mxu0 0.0
        %484 = vmatpush1.msra.mxu0 0.0
        %485 = vmatprep.subr.mxu0 0.0
        %486 = vmatpush1.msra.mxu0 0.0
        %487 = vmatprep.mubr.f32.mxu0 0.0
        %488 = vmatmul.mubr.f32.gmra.mrb[0].mxu0 %v421
        %v489 = vpop.f32.mrb[0].mxu0
        %v490 = vadd.f32 %v417, %v489
        %v491 = vpop.f32.mrb[0].mxu0
        %492 = vdwg.mxu0
        %v493 = vadd.f32 %v490, %v282
        %494 = vst.msk [vmem:[%s269] sm:$0xff] %vm283, %v493
        %s495 = sand.u32 %s181, 1
        %s496 = scalar_lea.sflag [#allocation3], %s495
        %s497 = sand.u32 %s181, 1
        %s498 = smul.addr %s497, 8
        %s499 = scalar_lea.vmem [#allocation2], %s498
        // Predicated region
        $region49: #{mlp1_forward.1} parent=47 // pred_check
          %p500 = pneg %p191
        $region50: #{mlp1_forward.1} parent=47 // pred_check_branch
          %502 = sbr.rel (%p500) target = $region52
        $region51: #{mlp1_forward.1} parent=47 // pred_region
          %s504 = ssub.s32 128, 128
          %505 = vsyncadd %s496, %s504
          %s506 = smul.addr %s21, 128
          %s507 = scalar_lea.hbm %s7, %s506
          %s509 = sshll.u32 %s499, 4
          %s510 = int_to_ptr.vmem [resolvable:$true] %s509
          %512 = dma.vmem_to_hbm [thread:$0]  %s510, 128, %s507, %s496
        $region52: #{mlp1_forward.1} parent=47 // pred_fallthru
          _
      $region48: #{mlp1_forward.1} parent=5 // pred_fallthru
        _
      %p513 = scmp.le.s32.totalorder 2, %s16
      // Predicated region
      $region53: #{mlp1_forward.1} parent=5 // pred_check
        %p514 = pneg %p513
      $region54: #{mlp1_forward.1} parent=5 // pred_check_branch
        %516 = sbr.rel (%p514) target = $region56
      $region55: #{mlp1_forward.1} parent=5 // pred_region
        %s517 = ssub.s32 %s16, 2
        // Predicated region
        $region57: #{mlp1_forward.1} parent=55 // pred_check
          %p518 = pneg %p197
        $region58: #{mlp1_forward.1} parent=55 // pred_check_branch
          %520 = sbr.rel (%p518) target = $region60
        $region59: #{mlp1_forward.1} parent=55 // pred_region
          %s521 = sand.u32 %s182, 1
          %s522 = scalar_lea.sflag [#allocation3], %s521
          %s523 = sand.u32 %s182, 1
          %s524 = smul.addr %s523, 8
          %s525 = scalar_lea.vmem [#allocation2], %s524
          %526 = dma.done %s522, 128
        $region60: #{mlp1_forward.1} parent=55 // pred_fallthru
          _
      $region56: #{mlp1_forward.1} parent=5 // pred_fallthru
        _
    $region6: #{mlp1_forward.1} parent=1 // loop_footer
      %s20 = sadd.s32 1, %s16
    $region7: #{mlp1_forward.1} parent=1 // loop_footer_branch
      %15 = sbr.rel target = $region3
    $region8: #{mlp1_forward.1} parent=1 // loop_exit
      _
    %527 = vsyncpa [#allocation3], 1
    %s528 = scalar_lea.sflag [#allocation3], 1
    %529 = vsyncpa %s528, 1

</llo_original>
